<compile_context>
chip_gen: v7x
topology: tpu7x:2x2x1
jax: 0.10.0
libtpu: 0.0.40
codegen_flags: <defaults>
</compile_context>

<pallas_src>
import jax
import jax.numpy as jnp
from jax import lax
from jax.experimental import pallas as pl
from jax.experimental.pallas import tpu as pltpu


def _ccc_kernel(f_ref, l_ref, o_ref):
    f = f_ref[...].astype(jnp.float32)            # [V, N1]
    l = l_ref[...].astype(jnp.float32)            # [V, N2]
    v, n1 = f.shape
    n2 = l.shape[1]
    n_obs = n1 + n2                               # observations of concat [f | l]

    # --- single reduction pass per operand; reused everywhere below ----------
    rsf = jnp.sum(f, axis=1, keepdims=True)       # [V, 1] row sums of features
    rsl = jnp.sum(l, axis=1, keepdims=True)       # [V, 1] row sums of labels
    mu = (rsf + rsl) * (1.0 / n_obs)              # per-row mean of concat [f | l]

    # --- torch.cov(cat([f, l], dim=1)), correction=1 --------------------------
    #   X = [f | l], Xc = X - rowmean(X)  =>  Xc @ Xc.T = fc @ fc.T + lc @ lc.T
    fc = f - mu                                   # [V, N1]
    lc = l - mu                                   # [V, N2]
    gram = (
        lax.dot_general(fc, fc, (((1,), (1,)), ((), ())),
                        precision=lax.Precision.HIGHEST,
                        preferred_element_type=jnp.float32)
        + lax.dot_general(lc, lc, (((1,), (1,)), ((), ())),
                          precision=lax.Precision.HIGHEST,
                          preferred_element_type=jnp.float32)
    )                                             # [V, V]
    cov = gram * (1.0 / (n_obs - 1))

    # --- scalar denominator: var()/mean() over ALL elements, unbiased ---------
    nf = v * n1
    nl = v * n2
    mf = jnp.sum(rsf, keepdims=True) * (1.0 / nf)     # (1,1) global mean of f
    ml = jnp.sum(rsl, keepdims=True) * (1.0 / nl)     # (1,1) global mean of l
    fm = f - mf                                       # centered on the global mean
    lm = l - ml
    vf = jnp.sum(fm * fm, keepdims=True) * (1.0 / (nf - 1))   # torch .var(): ddof=1
    vl = jnp.sum(lm * lm, keepdims=True) * (1.0 / (nl - 1))
    denom = vf + vl + (mf - ml) ** 2                  # (1,1)

    # Hoisted exact scalar reciprocal -> single broadcast multiply on the output.
    scale = 2.0 * pl.reciprocal(denom, approx=False)
    o_ref[...] = (cov * scale).astype(o_ref.dtype)


def ccc(features, labels):
    """CCC forward. Accepts [V, N] pairs or batched [B, V, N] pairs."""
    squeeze = features.ndim == 2
    if squeeze:
        features = features[None]
        labels = labels[None]
    B, V, N1 = features.shape
    B2, V2, N2 = labels.shape
    assert B == B2 and V == V2, "torch.cat(dim=1) requires matching dim 0"

    out = pl.pallas_call(
        _ccc_kernel,
        out_shape=jax.ShapeDtypeStruct((B, V, V), jnp.float32),
        grid=(B,),
        in_specs=[
            pl.BlockSpec((None, V, N1), lambda b: (b, 0, 0)),
            pl.BlockSpec((None, V, N2), lambda b: (b, 0, 0)),
        ],
        out_specs=pl.BlockSpec((None, V, V), lambda b: (b, 0, 0)),
        compiler_params=pltpu.CompilerParams(
            dimension_semantics=("parallel",)),   # batch axis across TCs on v7x
    )(features, labels)
    return out[0] if squeeze else out


def _ccc_reference(features, labels):
    """Pure-JAX reference of the exact torch expression."""
    x = jnp.concatenate([features, labels], axis=1)
    mu = jnp.mean(x, axis=1, keepdims=True)
    xc = x - mu
    cov = jnp.matmul(xc, xc.T, precision=lax.Precision.HIGHEST) / (x.shape[1] - 1)
    denom = (jnp.var(features, ddof=1) + jnp.var(labels, ddof=1)
             + (jnp.mean(features) - jnp.mean(labels)) ** 2)
    return 2.0 * cov / denom


if __name__ == "__main__":
    key = jax.random.PRNGKey(0)
    kf, kl, kb1, kb2 = jax.random.split(key, 4)

    # Single pair (matches the module's forward signature).
    V, N1, N2 = 8, 128, 128
    features = jax.random.normal(kf, (V, N1), dtype=jnp.float32)
    labels = 0.5 * jax.random.normal(kl, (V, N2), dtype=jnp.float32) + 0.1

    out = ccc(features, labels)
    jax.block_until_ready(out)
    ref = _ccc_reference(features, labels)
    assert out.shape == (V, V)
    assert jnp.allclose(out, ref, rtol=1e-5, atol=1e-5), "mismatch vs reference"

    # Batched pairs: one pallas_call, parallel grid axis.
    B = 2
    fb = jax.random.normal(kb1, (B, V, N1), dtype=jnp.float32)
    lb = 0.3 * jax.random.normal(kb2, (B, V, N2), dtype=jnp.float32) - 0.2
    outb = ccc(fb, lb)
    jax.block_until_ready(outb)
    refb = jax.vmap(_ccc_reference)(fb, lb)
    assert outb.shape == (B, V, V)
    assert jnp.allclose(outb, refb, rtol=1e-5, atol=1e-5), "batched mismatch"

    print("KERNEL_OK")
</pallas_src>

<mosaic_0001>
module attributes {stable_mosaic.version = 11 : i64} {
  func.func @_ccc_kernel(%arg0: i32, %arg1: memref<1x8x128xf32, #tpu.memory_space<vmem>>, %arg2: memref<1x8x128xf32, #tpu.memory_space<vmem>>, %arg3: memref<1x8x8xf32, #tpu.memory_space<vmem>>) attributes {dimension_semantics = [#tpu.dimension_semantics<parallel>], iteration_bounds = array<i64: 1>, scalar_prefetch = 0 : i64, scratch_operands = 0 : i64, tpu.core_type = #tpu.core_type<tc>, window_params = [{transform_indices = @transform_0, window_bounds = array<i64: 1, 8, 128>}, {transform_indices = @transform_1, window_bounds = array<i64: 1, 8, 128>}, {transform_indices = @transform_2, window_bounds = array<i64: 1, 8, 8>}]} {
    %c0 = arith.constant 0 : index
    %c0_0 = arith.constant 0 : index
    %c0_1 = arith.constant 0 : index
    %0 = vector.load %arg1[%c0, %c0_0, %c0_1] : memref<1x8x128xf32, #tpu.memory_space<vmem>>, vector<1x8x128xf32>
    %1 = vector.shape_cast %0 : vector<1x8x128xf32> to vector<8x128xf32>
    %c0_2 = arith.constant 0 : index
    %c0_3 = arith.constant 0 : index
    %c0_4 = arith.constant 0 : index
    %2 = vector.load %arg2[%c0_2, %c0_3, %c0_4] : memref<1x8x128xf32, #tpu.memory_space<vmem>>, vector<1x8x128xf32>
    %3 = vector.shape_cast %2 : vector<1x8x128xf32> to vector<8x128xf32>
    %cst = arith.constant dense<0.000000e+00> : vector<8xf32>
    %4 = vector.multi_reduction <add>, %1, %cst [1] : vector<8x128xf32> to vector<8xf32>
    %5 = vector.shape_cast %4 : vector<8xf32> to vector<8x1xf32>
    %cst_5 = arith.constant dense<0.000000e+00> : vector<8xf32>
    %6 = vector.multi_reduction <add>, %3, %cst_5 [1] : vector<8x128xf32> to vector<8xf32>
    %7 = vector.shape_cast %6 : vector<8xf32> to vector<8x1xf32>
    %8 = arith.addf %5, %7 : vector<8x1xf32>
    %cst_6 = arith.constant 3.906250e-03 : f32
    %9 = vector.broadcast %cst_6 : f32 to vector<8x1xf32>
    %10 = arith.mulf %8, %9 : vector<8x1xf32>
    %11 = vector.broadcast %10 : vector<8x1xf32> to vector<8x128xf32>
    %12 = arith.subf %1, %11 : vector<8x128xf32>
    %13 = vector.broadcast %10 : vector<8x1xf32> to vector<8x128xf32>
    %14 = arith.subf %3, %13 : vector<8x128xf32>
    %cst_7 = arith.constant dense<0.000000e+00> : vector<8x8xf32>
    %15 = tpu.matmul %12, %12, %cst_7 {dimension_numbers = #tpu.dot_dimension_numbers<[1], [1], [0], [0], [0, 0, 1, 0], [], []>, precision = #tpu.contract_precision<fp32>} : vector<8x128xf32>, vector<8x128xf32>, vector<8x8xf32> -> vector<8x8xf32>
    %cst_8 = arith.constant dense<0.000000e+00> : vector<8x8xf32>
    %16 = tpu.matmul %14, %14, %cst_8 {dimension_numbers = #tpu.dot_dimension_numbers<[1], [1], [0], [0], [0, 0, 1, 0], [], []>, precision = #tpu.contract_precision<fp32>} : vector<8x128xf32>, vector<8x128xf32>, vector<8x8xf32> -> vector<8x8xf32>
    %17 = arith.addf %15, %16 : vector<8x8xf32>
    %cst_9 = arith.constant 0.00392156886 : f32
    %18 = vector.broadcast %cst_9 : f32 to vector<8x8xf32>
    %19 = arith.mulf %17, %18 : vector<8x8xf32>
    %20 = vector.shape_cast %5 : vector<8x1xf32> to vector<1x8x1xf32>
    %cst_10 = arith.constant dense<0.000000e+00> : vector<1xf32>
    %21 = vector.multi_reduction <add>, %20, %cst_10 [1, 2] : vector<1x8x1xf32> to vector<1xf32>
    %22 = vector.shape_cast %21 : vector<1xf32> to vector<1x1x1xf32>
    %23 = vector.extract %22[0, 0, 0] : f32 from vector<1x1x1xf32>
    %24 = vector.broadcast %23 : f32 to vector<1x1xf32>
    %cst_11 = arith.constant 9.765625E-4 : f32
    %25 = vector.broadcast %cst_11 : f32 to vector<1x1xf32>
    %26 = arith.mulf %24, %25 : vector<1x1xf32>
    %27 = vector.shape_cast %7 : vector<8x1xf32> to vector<1x8x1xf32>
    %cst_12 = arith.constant dense<0.000000e+00> : vector<1xf32>
    %28 = vector.multi_reduction <add>, %27, %cst_12 [1, 2] : vector<1x8x1xf32> to vector<1xf32>
    %29 = vector.shape_cast %28 : vector<1xf32> to vector<1x1x1xf32>
    %30 = vector.extract %29[0, 0, 0] : f32 from vector<1x1x1xf32>
    %31 = vector.broadcast %30 : f32 to vector<1x1xf32>
    %cst_13 = arith.constant 9.765625E-4 : f32
    %32 = vector.broadcast %cst_13 : f32 to vector<1x1xf32>
    %33 = arith.mulf %31, %32 : vector<1x1xf32>
    %34 = vector.broadcast %26 : vector<1x1xf32> to vector<8x128xf32>
    %35 = arith.subf %1, %34 : vector<8x128xf32>
    %36 = vector.broadcast %33 : vector<1x1xf32> to vector<8x128xf32>
    %37 = arith.subf %3, %36 : vector<8x128xf32>
    %38 = arith.mulf %35, %35 : vector<8x128xf32>
    %39 = vector.shape_cast %38 : vector<8x128xf32> to vector<1x8x128xf32>
    %cst_14 = arith.constant dense<0.000000e+00> : vector<1xf32>
    %40 = vector.multi_reduction <add>, %39, %cst_14 [1, 2] : vector<1x8x128xf32> to vector<1xf32>
    %41 = vector.shape_cast %40 : vector<1xf32> to vector<1x1x1xf32>
    %42 = vector.extract %41[0, 0, 0] : f32 from vector<1x1x1xf32>
    %43 = vector.broadcast %42 : f32 to vector<1x1xf32>
    %cst_15 = arith.constant 9.77517105E-4 : f32
    %44 = vector.broadcast %cst_15 : f32 to vector<1x1xf32>
    %45 = arith.mulf %43, %44 : vector<1x1xf32>
    %46 = arith.mulf %37, %37 : vector<8x128xf32>
    %47 = vector.shape_cast %46 : vector<8x128xf32> to vector<1x8x128xf32>
    %cst_16 = arith.constant dense<0.000000e+00> : vector<1xf32>
    %48 = vector.multi_reduction <add>, %47, %cst_16 [1, 2] : vector<1x8x128xf32> to vector<1xf32>
    %49 = vector.shape_cast %48 : vector<1xf32> to vector<1x1x1xf32>
    %50 = vector.extract %49[0, 0, 0] : f32 from vector<1x1x1xf32>
    %51 = vector.broadcast %50 : f32 to vector<1x1xf32>
    %cst_17 = arith.constant 9.77517105E-4 : f32
    %52 = vector.broadcast %cst_17 : f32 to vector<1x1xf32>
    %53 = arith.mulf %51, %52 : vector<1x1xf32>
    %54 = arith.addf %45, %53 : vector<1x1xf32>
    %55 = arith.subf %26, %33 : vector<1x1xf32>
    %56 = arith.mulf %55, %55 : vector<1x1xf32>
    %57 = arith.addf %54, %56 : vector<1x1xf32>
    %58 = tpu.reciprocal %57 : vector<1x1xf32> -> vector<1x1xf32>
    %cst_18 = arith.constant 2.000000e+00 : f32
    %59 = vector.broadcast %cst_18 : f32 to vector<1x1xf32>
    %60 = arith.mulf %59, %58 : vector<1x1xf32>
    %61 = vector.broadcast %60 : vector<1x1xf32> to vector<8x8xf32>
    %62 = arith.mulf %19, %61 : vector<8x8xf32>
    %c0_19 = arith.constant 0 : index
    %c0_20 = arith.constant 0 : index
    %c0_21 = arith.constant 0 : index
    %63 = vector.load %arg3[%c0_19, %c0_20, %c0_21] : memref<1x8x8xf32, #tpu.memory_space<vmem>>, vector<1x8x8xf32>
    %64 = vector.shape_cast %63 : vector<1x8x8xf32> to vector<8x8xf32>
    %65 = vector.shape_cast %62 : vector<8x8xf32> to vector<1x8x8xf32>
    tpu.vector_store %arg3[%c0_19, %c0_20, %c0_21], %65 {strides = array<i32>} : memref<1x8x8xf32, #tpu.memory_space<vmem>>, vector<1x8x8xf32>,
    return
  }
  func.func @transform_0(%arg0: i32) -> (i32, i32, i32) {
    %c0_i32 = arith.constant 0 : i32
    %c0_i32_0 = arith.constant 0 : i32
    %c0_i32_1 = arith.constant 0 : i32
    return %arg0, %c0_i32, %c0_i32_0 : i32, i32, i32
  }
  func.func @transform_1(%arg0: i32) -> (i32, i32, i32) {
    %c0_i32 = arith.constant 0 : i32
    %c0_i32_0 = arith.constant 0 : i32
    %c0_i32_1 = arith.constant 0 : i32
    return %arg0, %c0_i32, %c0_i32_0 : i32, i32, i32
  }
  func.func @transform_2(%arg0: i32) -> (i32, i32, i32) {
    %c0_i32 = arith.constant 0 : i32
    %c0_i32_0 = arith.constant 0 : i32
    %c0_i32_1 = arith.constant 0 : i32
    return %arg0, %c0_i32, %c0_i32_0 : i32, i32, i32
  }
}

</mosaic_0001>

<llo_original>
// kernel: tpu_custom_call.1
$region0: #{tpu_custom_call.1}
  #allocation0 [shape = 'u32[]', space=smem, size = 0x4, offset = 0x4, fixed_abs, tag = 'smem constant byte address 0x4 - core index']
  #allocation1 [shape = 'u32[144,128]{1,0:T(1,128)}', space=vmem, size = 0x12000, scoped, tag = 'internal scratch']
  %s0 = inlined_call_operand.hbm [shape: f32[1,8,128], index: 0, kind: input, shape index: {}]
  %s1 = inlined_call_operand.hbm [shape: f32[1,8,128], index: 1, kind: input, shape index: {}]
  %s2 = inlined_call_operand.hbm [shape: f32[1,8,8], index: 2, kind: output, shape index: {}]
  %s3 = sld [smem:[#allocation0]]
  $region26: #{tpu_custom_call.1} parent=0
    _
  %s5 = ssub.s32 1, %s3
  %s6 = scalar_select 0, %s5, %s3
  $region1: #{tpu_custom_call.1} parent=0
    #allocation2 [shape = 'u8[4096]{0}', space=vmem, size = 0x1000, scoped, tag = 'input window, operand 0, single buffered']
    #allocation3 [shape = 's32[1]{0}', space=sflag, size = 0x4, scoped, tag = 'scoped memory for tpu_custom_call.1']
    #allocation4 [shape = 's32[1]{0}', space=sflag, size = 0x4, scoped, tag = 'scoped memory for tpu_custom_call.1']
    #allocation5 [shape = 'u8[4096]{0}', space=vmem, size = 0x1000, scoped, tag = 'input window, operand 1, single buffered']
    #allocation6 [shape = 's32[1]{0}', space=sflag, size = 0x4, scoped, tag = 'scoped memory for tpu_custom_call.1']
    #allocation7 [shape = 'u8[4096]{0}', space=vmem, size = 0x1000, scoped, tag = 'output window, operand 0, single buffered']
    %7 = vsyncpa [#allocation3], 0
    %8 = vsyncpa [#allocation6], 0
    %9 = vsyncpa [#allocation4], 0
    // Predicated region
    $region2: #{tpu_custom_call.1} parent=1 // pred_check
      _
    $region3: #{tpu_custom_call.1} parent=1 // pred_check_branch
      %11 = sbr.rel (0) target = $region5
    $region4: #{tpu_custom_call.1} parent=1 // pred_region
      %s13 = ssub.s32 128, 128
      %14 = vsyncadd [#allocation3], %s13
      %s16 = sshll.u32 [#allocation2], 4
      %s17 = int_to_ptr.vmem [resolvable:$true] %s16
      %19 = dma.hbm_to_vmem [thread:$0]  %s0, 128, %s17, [#allocation3]
    $region5: #{tpu_custom_call.1} parent=1 // pred_fallthru
      _
    // Predicated region
    $region6: #{tpu_custom_call.1} parent=1 // pred_check
      _
    $region7: #{tpu_custom_call.1} parent=1 // pred_check_branch
      %21 = sbr.rel (0) target = $region9
    $region8: #{tpu_custom_call.1} parent=1 // pred_region
      %s23 = ssub.s32 128, 128
      %24 = vsyncadd [#allocation6], %s23
      %s26 = sshll.u32 [#allocation5], 4
      %s27 = int_to_ptr.vmem [resolvable:$true] %s26
      %29 = dma.hbm_to_vmem [thread:$0]  %s1, 128, %s27, [#allocation6]
    $region9: #{tpu_custom_call.1} parent=1 // pred_fallthru
      _
    // Predicated region
    $region10: #{tpu_custom_call.1} parent=1 // pred_check
      _
    $region11: #{tpu_custom_call.1} parent=1 // pred_check_branch
      %31 = sbr.rel (0) target = $region13
    $region12: #{tpu_custom_call.1} parent=1 // pred_region
      %32 = dma.done [#allocation3], 128
    $region13: #{tpu_custom_call.1} parent=1 // pred_fallthru
      _
    // Predicated region
    $region14: #{tpu_custom_call.1} parent=1 // pred_check
      _
    $region15: #{tpu_custom_call.1} parent=1 // pred_check_branch
      %34 = sbr.rel (0) target = $region17
    $region16: #{tpu_custom_call.1} parent=1 // pred_region
      %35 = dma.done [#allocation6], 128
    $region17: #{tpu_custom_call.1} parent=1 // pred_fallthru
      _
    %v36 = vld [vmem:[#allocation2] sm:$0xff]
    %v37 = vld [vmem:[#allocation5] sm:$0xff]
    %38 = vadd.xlane.f32.xlu0 %v36
    %v39 = vpop.xlane.xlu0 %38
    %40 = vadd.xlane.f32.xlu0 %v37
    %v41 = vpop.xlane.xlu0 %40
    %v42 = vadd.f32 %v39, %v41
    %v43 = vmul.f32 %v42, 0.00390625
    %v44 = vsub.f32 %v36, %v43
    %v45 = vsub.f32 %v37, %v43
    %46 = vmatprep.subr.mxu0 0.0
    %v47 = vand.u32 %v45, 4294901760
    %48 = vmatpush1.xpose.msra.mxu0 %v47
    %49 = vmatprep.subr.mxu0 0.0
    %50 = vmatpush1.xpose.msra.mxu0 0.0
    %51 = vmatprep.subr.mxu0 0.0
    %52 = vmatpush1.xpose.msra.mxu0 0.0
    %53 = vmatprep.subr.mxu0 0.0
    %54 = vmatpush1.xpose.msra.mxu0 0.0
    %55 = vmatprep.subr.mxu0 0.0
    %56 = vmatpush1.xpose.msra.mxu0 0.0
    %57 = vmatprep.subr.mxu0 0.0
    %58 = vmatpush1.xpose.msra.mxu0 0.0
    %59 = vmatprep.subr.mxu0 0.0
    %60 = vmatpush1.xpose.msra.mxu0 0.0
    %61 = vmatprep.subr.mxu0 0.0
    %62 = vmatpush1.xpose.msra.mxu0 0.0
    %63 = vmatprep.subr.mxu0 0.0
    %64 = vmatpush1.xpose.msra.mxu0 0.0
    %65 = vmatprep.subr.mxu0 0.0
    %66 = vmatpush1.xpose.msra.mxu0 0.0
    %67 = vmatprep.subr.mxu0 0.0
    %68 = vmatpush1.xpose.msra.mxu0 0.0
    %69 = vmatprep.subr.mxu0 0.0
    %70 = vmatpush1.xpose.msra.mxu0 0.0
    %71 = vmatprep.subr.mxu0 0.0
    %72 = vmatpush1.xpose.msra.mxu0 0.0
    %73 = vmatprep.subr.mxu0 0.0
    %74 = vmatpush1.xpose.msra.mxu0 0.0
    %75 = vmatprep.subr.mxu0 0.0
    %76 = vmatpush1.xpose.msra.mxu0 0.0
    %77 = vmatprep.subr.mxu0 0.0
    %78 = vmatpush1.xpose.msra.mxu0 0.0
    %79 = vmatprep.subr.mxu0 0.0
    %80 = vmatpush1.xpose.msra.mxu0 0.0
    %81 = vmatprep.subr.mxu0 0.0
    %82 = vmatpush1.xpose.msra.mxu0 0.0
    %83 = vmatprep.subr.mxu0 0.0
    %84 = vmatpush1.xpose.msra.mxu0 0.0
    %85 = vmatprep.subr.mxu0 0.0
    %86 = vmatpush1.xpose.msra.mxu0 0.0
    %87 = vmatprep.subr.mxu0 0.0
    %88 = vmatpush1.xpose.msra.mxu0 0.0
    %89 = vmatprep.subr.mxu0 0.0
    %90 = vmatpush1.xpose.msra.mxu0 0.0
    %91 = vmatprep.subr.mxu0 0.0
    %92 = vmatpush1.xpose.msra.mxu0 0.0
    %93 = vmatprep.subr.mxu0 0.0
    %94 = vmatpush1.xpose.msra.mxu0 0.0
    %95 = vmatprep.subr.mxu0 0.0
    %96 = vmatpush1.xpose.msra.mxu0 0.0
    %97 = vmatprep.subr.mxu0 0.0
    %98 = vmatpush1.xpose.msra.mxu0 0.0
    %99 = vmatprep.subr.mxu0 0.0
    %100 = vmatpush1.xpose.msra.mxu0 0.0
    %101 = vmatprep.subr.mxu0 0.0
    %102 = vmatpush1.xpose.msra.mxu0 0.0
    %103 = vmatprep.subr.mxu0 0.0
    %104 = vmatpush1.xpose.msra.mxu0 0.0
    %105 = vmatprep.subr.mxu0 0.0
    %106 = vmatpush1.xpose.msra.mxu0 0.0
    %107 = vmatprep.subr.mxu0 0.0
    %108 = vmatpush1.xpose.msra.mxu0 0.0
    %109 = vmatprep.subr.mxu0 0.0
    %110 = vmatpush1.xpose.msra.mxu0 0.0
    %111 = vmatprep.mubr.f32.mxu0 0.0
    %v112 = vand.u32 %v45, 4294901760
    %v113 = vsub.f32 %v45, %v112
    %v114 = vand.u32 %v113, 4294901760
    %v115 = vsub.f32 %v113, %v114
    %v116 = vand.u32 %v115, 4294901760
    %117 = vmatmul.mubr.f32.gmra.mrb[0].mxu0 %v116
    %v118 = vpop.f32.mrb[0].mxu0
    %v119 = vadd.f32 0.0, %v118
    %v120 = vpop.f32.mrb[0].mxu0
    %121 = vdwg.mxu0
    %122 = vmatprep.subr.mxu0 0.0
    %v123 = vand.u32 %v45, 4294901760
    %v124 = vsub.f32 %v45, %v123
    %v125 = vand.u32 %v124, 4294901760
    %v126 = vsub.f32 %v124, %v125
    %v127 = vand.u32 %v126, 4294901760
    %128 = vmatpush1.xpose.msra.mxu0 %v127
    %129 = vmatprep.subr.mxu0 0.0
    %130 = vmatpush1.xpose.msra.mxu0 0.0
    %131 = vmatprep.subr.mxu0 0.0
    %132 = vmatpush1.xpose.msra.mxu0 0.0
    %133 = vmatprep.subr.mxu0 0.0
    %134 = vmatpush1.xpose.msra.mxu0 0.0
    %135 = vmatprep.subr.mxu0 0.0
    %136 = vmatpush1.xpose.msra.mxu0 0.0
    %137 = vmatprep.subr.mxu0 0.0
    %138 = vmatpush1.xpose.msra.mxu0 0.0
    %139 = vmatprep.subr.mxu0 0.0
    %140 = vmatpush1.xpose.msra.mxu0 0.0
    %141 = vmatprep.subr.mxu0 0.0
    %142 = vmatpush1.xpose.msra.mxu0 0.0
    %143 = vmatprep.subr.mxu0 0.0
    %144 = vmatpush1.xpose.msra.mxu0 0.0
    %145 = vmatprep.subr.mxu0 0.0
    %146 = vmatpush1.xpose.msra.mxu0 0.0
    %147 = vmatprep.subr.mxu0 0.0
    %148 = vmatpush1.xpose.msra.mxu0 0.0
    %149 = vmatprep.subr.mxu0 0.0
    %150 = vmatpush1.xpose.msra.mxu0 0.0
    %151 = vmatprep.subr.mxu0 0.0
    %152 = vmatpush1.xpose.msra.mxu0 0.0
    %153 = vmatprep.subr.mxu0 0.0
    %154 = vmatpush1.xpose.msra.mxu0 0.0
    %155 = vmatprep.subr.mxu0 0.0
    %156 = vmatpush1.xpose.msra.mxu0 0.0
    %157 = vmatprep.subr.mxu0 0.0
    %158 = vmatpush1.xpose.msra.mxu0 0.0
    %159 = vmatprep.subr.mxu0 0.0
    %160 = vmatpush1.xpose.msra.mxu0 0.0
    %161 = vmatprep.subr.mxu0 0.0
    %162 = vmatpush1.xpose.msra.mxu0 0.0
    %163 = vmatprep.subr.mxu0 0.0
    %164 = vmatpush1.xpose.msra.mxu0 0.0
    %165 = vmatprep.subr.mxu0 0.0
    %166 = vmatpush1.xpose.msra.mxu0 0.0
    %167 = vmatprep.subr.mxu0 0.0
    %168 = vmatpush1.xpose.msra.mxu0 0.0
    %169 = vmatprep.subr.mxu0 0.0
    %170 = vmatpush1.xpose.msra.mxu0 0.0
    %171 = vmatprep.subr.mxu0 0.0
    %172 = vmatpush1.xpose.msra.mxu0 0.0
    %173 = vmatprep.subr.mxu0 0.0
    %174 = vmatpush1.xpose.msra.mxu0 0.0
    %175 = vmatprep.subr.mxu0 0.0
    %176 = vmatpush1.xpose.msra.mxu0 0.0
    %177 = vmatprep.subr.mxu0 0.0
    %178 = vmatpush1.xpose.msra.mxu0 0.0
    %179 = vmatprep.subr.mxu0 0.0
    %180 = vmatpush1.xpose.msra.mxu0 0.0
    %181 = vmatprep.subr.mxu0 0.0
    %182 = vmatpush1.xpose.msra.mxu0 0.0
    %183 = vmatprep.subr.mxu0 0.0
    %184 = vmatpush1.xpose.msra.mxu0 0.0
    %185 = vmatprep.subr.mxu0 0.0
    %186 = vmatpush1.xpose.msra.mxu0 0.0
    %187 = vmatprep.subr.mxu0 0.0
    %188 = vmatpush1.xpose.msra.mxu0 0.0
    %189 = vmatprep.subr.mxu0 0.0
    %190 = vmatpush1.xpose.msra.mxu0 0.0
    %191 = vmatprep.mubr.f32.mxu0 0.0
    %v192 = vand.u32 %v45, 4294901760
    %193 = vmatmul.mubr.f32.gmra.mrb[0].mxu0 %v192
    %v194 = vpop.f32.mrb[0].mxu0
    %v195 = vadd.f32 %v119, %v194
    %v196 = vpop.f32.mrb[0].mxu0
    %197 = vdwg.mxu0
    %198 = vmatprep.subr.mxu0 0.0
    %v199 = vand.u32 %v45, 4294901760
    %v200 = vsub.f32 %v45, %v199
    %201 = vmatpush1.xpose.msra.mxu0 %v200
    %202 = vmatprep.subr.mxu0 0.0
    %203 = vmatpush1.xpose.msra.mxu0 0.0
    %204 = vmatprep.subr.mxu0 0.0
    %205 = vmatpush1.xpose.msra.mxu0 0.0
    %206 = vmatprep.subr.mxu0 0.0
    %207 = vmatpush1.xpose.msra.mxu0 0.0
    %208 = vmatprep.subr.mxu0 0.0
    %209 = vmatpush1.xpose.msra.mxu0 0.0
    %210 = vmatprep.subr.mxu0 0.0
    %211 = vmatpush1.xpose.msra.mxu0 0.0
    %212 = vmatprep.subr.mxu0 0.0
    %213 = vmatpush1.xpose.msra.mxu0 0.0
    %214 = vmatprep.subr.mxu0 0.0
    %215 = vmatpush1.xpose.msra.mxu0 0.0
    %216 = vmatprep.subr.mxu0 0.0
    %217 = vmatpush1.xpose.msra.mxu0 0.0
    %218 = vmatprep.subr.mxu0 0.0
    %219 = vmatpush1.xpose.msra.mxu0 0.0
    %220 = vmatprep.subr.mxu0 0.0
    %221 = vmatpush1.xpose.msra.mxu0 0.0
    %222 = vmatprep.subr.mxu0 0.0
    %223 = vmatpush1.xpose.msra.mxu0 0.0
    %224 = vmatprep.subr.mxu0 0.0
    %225 = vmatpush1.xpose.msra.mxu0 0.0
    %226 = vmatprep.subr.mxu0 0.0
    %227 = vmatpush1.xpose.msra.mxu0 0.0
    %228 = vmatprep.subr.mxu0 0.0
    %229 = vmatpush1.xpose.msra.mxu0 0.0
    %230 = vmatprep.subr.mxu0 0.0
    %231 = vmatpush1.xpose.msra.mxu0 0.0
    %232 = vmatprep.subr.mxu0 0.0
    %233 = vmatpush1.xpose.msra.mxu0 0.0
    %234 = vmatprep.subr.mxu0 0.0
    %235 = vmatpush1.xpose.msra.mxu0 0.0
    %236 = vmatprep.subr.mxu0 0.0
    %237 = vmatpush1.xpose.msra.mxu0 0.0
    %238 = vmatprep.subr.mxu0 0.0
    %239 = vmatpush1.xpose.msra.mxu0 0.0
    %240 = vmatprep.subr.mxu0 0.0
    %241 = vmatpush1.xpose.msra.mxu0 0.0
    %242 = vmatprep.subr.mxu0 0.0
    %243 = vmatpush1.xpose.msra.mxu0 0.0
    %244 = vmatprep.subr.mxu0 0.0
    %245 = vmatpush1.xpose.msra.mxu0 0.0
    %246 = vmatprep.subr.mxu0 0.0
    %247 = vmatpush1.xpose.msra.mxu0 0.0
    %248 = vmatprep.subr.mxu0 0.0
    %249 = vmatpush1.xpose.msra.mxu0 0.0
    %250 = vmatprep.subr.mxu0 0.0
    %251 = vmatpush1.xpose.msra.mxu0 0.0
    %252 = vmatprep.subr.mxu0 0.0
    %253 = vmatpush1.xpose.msra.mxu0 0.0
    %254 = vmatprep.subr.mxu0 0.0
    %255 = vmatpush1.xpose.msra.mxu0 0.0
    %256 = vmatprep.subr.mxu0 0.0
    %257 = vmatpush1.xpose.msra.mxu0 0.0
    %258 = vmatprep.subr.mxu0 0.0
    %259 = vmatpush1.xpose.msra.mxu0 0.0
    %260 = vmatprep.subr.mxu0 0.0
    %261 = vmatpush1.xpose.msra.mxu0 0.0
    %262 = vmatprep.subr.mxu0 0.0
    %263 = vmatpush1.xpose.msra.mxu0 0.0
    %264 = vmatprep.mubr.f32.mxu0 0.0
    %v265 = vand.u32 %v45, 4294901760
    %v266 = vsub.f32 %v45, %v265
    %267 = vmatmul.mubr.f32.gmra.mrb[0].mxu0 %v266
    %v268 = vpop.f32.mrb[0].mxu0
    %v269 = vadd.f32 %v195, %v268
    %v270 = vpop.f32.mrb[0].mxu0
    %271 = vdwg.mxu0
    %272 = vmatprep.subr.mxu0 0.0
    %v273 = vand.u32 %v45, 4294901760
    %274 = vmatpush1.xpose.msra.mxu0 %v273
    %275 = vmatprep.subr.mxu0 0.0
    %276 = vmatpush1.xpose.msra.mxu0 0.0
    %277 = vmatprep.subr.mxu0 0.0
    %278 = vmatpush1.xpose.msra.mxu0 0.0
    %279 = vmatprep.subr.mxu0 0.0
    %280 = vmatpush1.xpose.msra.mxu0 0.0
    %281 = vmatprep.subr.mxu0 0.0
    %282 = vmatpush1.xpose.msra.mxu0 0.0
    %283 = vmatprep.subr.mxu0 0.0
    %284 = vmatpush1.xpose.msra.mxu0 0.0
    %285 = vmatprep.subr.mxu0 0.0
    %286 = vmatpush1.xpose.msra.mxu0 0.0
    %287 = vmatprep.subr.mxu0 0.0
    %288 = vmatpush1.xpose.msra.mxu0 0.0
    %289 = vmatprep.subr.mxu0 0.0
    %290 = vmatpush1.xpose.msra.mxu0 0.0
    %291 = vmatprep.subr.mxu0 0.0
    %292 = vmatpush1.xpose.msra.mxu0 0.0
    %293 = vmatprep.subr.mxu0 0.0
    %294 = vmatpush1.xpose.msra.mxu0 0.0
    %295 = vmatprep.subr.mxu0 0.0
    %296 = vmatpush1.xpose.msra.mxu0 0.0
    %297 = vmatprep.subr.mxu0 0.0
    %298 = vmatpush1.xpose.msra.mxu0 0.0
    %299 = vmatprep.subr.mxu0 0.0
    %300 = vmatpush1.xpose.msra.mxu0 0.0
    %301 = vmatprep.subr.mxu0 0.0
    %302 = vmatpush1.xpose.msra.mxu0 0.0
    %303 = vmatprep.subr.mxu0 0.0
    %304 = vmatpush1.xpose.msra.mxu0 0.0
    %305 = vmatprep.subr.mxu0 0.0
    %306 = vmatpush1.xpose.msra.mxu0 0.0
    %307 = vmatprep.subr.mxu0 0.0
    %308 = vmatpush1.xpose.msra.mxu0 0.0
    %309 = vmatprep.subr.mxu0 0.0
    %310 = vmatpush1.xpose.msra.mxu0 0.0
    %311 = vmatprep.subr.mxu0 0.0
    %312 = vmatpush1.xpose.msra.mxu0 0.0
    %313 = vmatprep.subr.mxu0 0.0
    %314 = vmatpush1.xpose.msra.mxu0 0.0
    %315 = vmatprep.subr.mxu0 0.0
    %316 = vmatpush1.xpose.msra.mxu0 0.0
    %317 = vmatprep.subr.mxu0 0.0
    %318 = vmatpush1.xpose.msra.mxu0 0.0
    %319 = vmatprep.subr.mxu0 0.0
    %320 = vmatpush1.xpose.msra.mxu0 0.0
    %321 = vmatprep.subr.mxu0 0.0
    %322 = vmatpush1.xpose.msra.mxu0 0.0
    %323 = vmatprep.subr.mxu0 0.0
    %324 = vmatpush1.xpose.msra.mxu0 0.0
    %325 = vmatprep.subr.mxu0 0.0
    %326 = vmatpush1.xpose.msra.mxu0 0.0
    %327 = vmatprep.subr.mxu0 0.0
    %328 = vmatpush1.xpose.msra.mxu0 0.0
    %329 = vmatprep.subr.mxu0 0.0
    %330 = vmatpush1.xpose.msra.mxu0 0.0
    %331 = vmatprep.subr.mxu0 0.0
    %332 = vmatpush1.xpose.msra.mxu0 0.0
    %333 = vmatprep.subr.mxu0 0.0
    %334 = vmatpush1.xpose.msra.mxu0 0.0
    %335 = vmatprep.subr.mxu0 0.0
    %336 = vmatpush1.xpose.msra.mxu0 0.0
    %337 = vmatprep.mubr.f32.mxu0 0.0
    %v338 = vand.u32 %v45, 4294901760
    %v339 = vsub.f32 %v45, %v338
    %v340 = vand.u32 %v339, 4294901760
    %341 = vmatmul.mubr.f32.gmra.mrb[0].mxu0 %v340
    %v342 = vpop.f32.mrb[0].mxu0
    %v343 = vadd.f32 %v269, %v342
    %v344 = vpop.f32.mrb[0].mxu0
    %345 = vdwg.mxu0
    %346 = vmatprep.subr.mxu0 0.0
    %v347 = vand.u32 %v45, 4294901760
    %v348 = vsub.f32 %v45, %v347
    %v349 = vand.u32 %v348, 4294901760
    %350 = vmatpush1.xpose.msra.mxu0 %v349
    %351 = vmatprep.subr.mxu0 0.0
    %352 = vmatpush1.xpose.msra.mxu0 0.0
    %353 = vmatprep.subr.mxu0 0.0
    %354 = vmatpush1.xpose.msra.mxu0 0.0
    %355 = vmatprep.subr.mxu0 0.0
    %356 = vmatpush1.xpose.msra.mxu0 0.0
    %357 = vmatprep.subr.mxu0 0.0
    %358 = vmatpush1.xpose.msra.mxu0 0.0
    %359 = vmatprep.subr.mxu0 0.0
    %360 = vmatpush1.xpose.msra.mxu0 0.0
    %361 = vmatprep.subr.mxu0 0.0
    %362 = vmatpush1.xpose.msra.mxu0 0.0
    %363 = vmatprep.subr.mxu0 0.0
    %364 = vmatpush1.xpose.msra.mxu0 0.0
    %365 = vmatprep.subr.mxu0 0.0
    %366 = vmatpush1.xpose.msra.mxu0 0.0
    %367 = vmatprep.subr.mxu0 0.0
    %368 = vmatpush1.xpose.msra.mxu0 0.0
    %369 = vmatprep.subr.mxu0 0.0
    %370 = vmatpush1.xpose.msra.mxu0 0.0
    %371 = vmatprep.subr.mxu0 0.0
    %372 = vmatpush1.xpose.msra.mxu0 0.0
    %373 = vmatprep.subr.mxu0 0.0
    %374 = vmatpush1.xpose.msra.mxu0 0.0
    %375 = vmatprep.subr.mxu0 0.0
    %376 = vmatpush1.xpose.msra.mxu0 0.0
    %377 = vmatprep.subr.mxu0 0.0
    %378 = vmatpush1.xpose.msra.mxu0 0.0
    %379 = vmatprep.subr.mxu0 0.0
    %380 = vmatpush1.xpose.msra.mxu0 0.0
    %381 = vmatprep.subr.mxu0 0.0
    %382 = vmatpush1.xpose.msra.mxu0 0.0
    %383 = vmatprep.subr.mxu0 0.0
    %384 = vmatpush1.xpose.msra.mxu0 0.0
    %385 = vmatprep.subr.mxu0 0.0
    %386 = vmatpush1.xpose.msra.mxu0 0.0
    %387 = vmatprep.subr.mxu0 0.0
    %388 = vmatpush1.xpose.msra.mxu0 0.0
    %389 = vmatprep.subr.mxu0 0.0
    %390 = vmatpush1.xpose.msra.mxu0 0.0
    %391 = vmatprep.subr.mxu0 0.0
    %392 = vmatpush1.xpose.msra.mxu0 0.0
    %393 = vmatprep.subr.mxu0 0.0
    %394 = vmatpush1.xpose.msra.mxu0 0.0
    %395 = vmatprep.subr.mxu0 0.0
    %396 = vmatpush1.xpose.msra.mxu0 0.0
    %397 = vmatprep.subr.mxu0 0.0
    %398 = vmatpush1.xpose.msra.mxu0 0.0
    %399 = vmatprep.subr.mxu0 0.0
    %400 = vmatpush1.xpose.msra.mxu0 0.0
    %401 = vmatprep.subr.mxu0 0.0
    %402 = vmatpush1.xpose.msra.mxu0 0.0
    %403 = vmatprep.subr.mxu0 0.0
    %404 = vmatpush1.xpose.msra.mxu0 0.0
    %405 = vmatprep.subr.mxu0 0.0
    %406 = vmatpush1.xpose.msra.mxu0 0.0
    %407 = vmatprep.subr.mxu0 0.0
    %408 = vmatpush1.xpose.msra.mxu0 0.0
    %409 = vmatprep.subr.mxu0 0.0
    %410 = vmatpush1.xpose.msra.mxu0 0.0
    %411 = vmatprep.subr.mxu0 0.0
    %412 = vmatpush1.xpose.msra.mxu0 0.0
    %413 = vmatprep.mubr.f32.mxu0 0.0
    %v414 = vand.u32 %v45, 4294901760
    %415 = vmatmul.mubr.f32.gmra.mrb[0].mxu0 %v414
    %v416 = vpop.f32.mrb[0].mxu0
    %v417 = vadd.f32 %v343, %v416
    %v418 = vpop.f32.mrb[0].mxu0
    %419 = vdwg.mxu0
    %420 = vmatprep.subr.mxu0 0.0
    %v421 = vand.u32 %v45, 4294901760
    %422 = vmatpush1.xpose.msra.mxu0 %v421
    %423 = vmatprep.subr.mxu0 0.0
    %424 = vmatpush1.xpose.msra.mxu0 0.0
    %425 = vmatprep.subr.mxu0 0.0
    %426 = vmatpush1.xpose.msra.mxu0 0.0
    %427 = vmatprep.subr.mxu0 0.0
    %428 = vmatpush1.xpose.msra.mxu0 0.0
    %429 = vmatprep.subr.mxu0 0.0
    %430 = vmatpush1.xpose.msra.mxu0 0.0
    %431 = vmatprep.subr.mxu0 0.0
    %432 = vmatpush1.xpose.msra.mxu0 0.0
    %433 = vmatprep.subr.mxu0 0.0
    %434 = vmatpush1.xpose.msra.mxu0 0.0
    %435 = vmatprep.subr.mxu0 0.0
    %436 = vmatpush1.xpose.msra.mxu0 0.0
    %437 = vmatprep.subr.mxu0 0.0
    %438 = vmatpush1.xpose.msra.mxu0 0.0
    %439 = vmatprep.subr.mxu0 0.0
    %440 = vmatpush1.xpose.msra.mxu0 0.0
    %441 = vmatprep.subr.mxu0 0.0
    %442 = vmatpush1.xpose.msra.mxu0 0.0
    %443 = vmatprep.subr.mxu0 0.0
    %444 = vmatpush1.xpose.msra.mxu0 0.0
    %445 = vmatprep.subr.mxu0 0.0
    %446 = vmatpush1.xpose.msra.mxu0 0.0
    %447 = vmatprep.subr.mxu0 0.0
    %448 = vmatpush1.xpose.msra.mxu0 0.0
    %449 = vmatprep.subr.mxu0 0.0
    %450 = vmatpush1.xpose.msra.mxu0 0.0
    %451 = vmatprep.subr.mxu0 0.0
    %452 = vmatpush1.xpose.msra.mxu0 0.0
    %453 = vmatprep.subr.mxu0 0.0
    %454 = vmatpush1.xpose.msra.mxu0 0.0
    %455 = vmatprep.subr.mxu0 0.0
    %456 = vmatpush1.xpose.msra.mxu0 0.0
    %457 = vmatprep.subr.mxu0 0.0
    %458 = vmatpush1.xpose.msra.mxu0 0.0
    %459 = vmatprep.subr.mxu0 0.0
    %460 = vmatpush1.xpose.msra.mxu0 0.0
    %461 = vmatprep.subr.mxu0 0.0
    %462 = vmatpush1.xpose.msra.mxu0 0.0
    %463 = vmatprep.subr.mxu0 0.0
    %464 = vmatpush1.xpose.msra.mxu0 0.0
    %465 = vmatprep.subr.mxu0 0.0
    %466 = vmatpush1.xpose.msra.mxu0 0.0
    %467 = vmatprep.subr.mxu0 0.0
    %468 = vmatpush1.xpose.msra.mxu0 0.0
    %469 = vmatprep.subr.mxu0 0.0
    %470 = vmatpush1.xpose.msra.mxu0 0.0
    %471 = vmatprep.subr.mxu0 0.0
    %472 = vmatpush1.xpose.msra.mxu0 0.0
    %473 = vmatprep.subr.mxu0 0.0
    %474 = vmatpush1.xpose.msra.mxu0 0.0
    %475 = vmatprep.subr.mxu0 0.0
    %476 = vmatpush1.xpose.msra.mxu0 0.0
    %477 = vmatprep.subr.mxu0 0.0
    %478 = vmatpush1.xpose.msra.mxu0 0.0
    %479 = vmatprep.subr.mxu0 0.0
    %480 = vmatpush1.xpose.msra.mxu0 0.0
    %481 = vmatprep.subr.mxu0 0.0
    %482 = vmatpush1.xpose.msra.mxu0 0.0
    %483 = vmatprep.subr.mxu0 0.0
    %484 = vmatpush1.xpose.msra.mxu0 0.0
    %485 = vmatprep.mubr.f32.mxu0 0.0
    %v486 = vand.u32 %v45, 4294901760
    %487 = vmatmul.mubr.f32.gmra.mrb[0].mxu0 %v486
    %v488 = vpop.f32.mrb[0].mxu0
    %v489 = vadd.f32 %v417, %v488
    %v490 = vpop.f32.mrb[0].mxu0
    %491 = vdwg.mxu0
    %492 = vmatprep.subr.mxu0 0.0
    %v493 = vand.u32 %v44, 4294901760
    %494 = vmatpush1.xpose.msra.mxu0 %v493
    %495 = vmatprep.subr.mxu0 0.0
    %496 = vmatpush1.xpose.msra.mxu0 0.0
    %497 = vmatprep.subr.mxu0 0.0
    %498 = vmatpush1.xpose.msra.mxu0 0.0
    %499 = vmatprep.subr.mxu0 0.0
    %500 = vmatpush1.xpose.msra.mxu0 0.0
    %501 = vmatprep.subr.mxu0 0.0
    %502 = vmatpush1.xpose.msra.mxu0 0.0
    %503 = vmatprep.subr.mxu0 0.0
    %504 = vmatpush1.xpose.msra.mxu0 0.0
    %505 = vmatprep.subr.mxu0 0.0
    %506 = vmatpush1.xpose.msra.mxu0 0.0
    %507 = vmatprep.subr.mxu0 0.0
    %508 = vmatpush1.xpose.msra.mxu0 0.0
    %509 = vmatprep.subr.mxu0 0.0
    %510 = vmatpush1.xpose.msra.mxu0 0.0
    %511 = vmatprep.subr.mxu0 0.0
    %512 = vmatpush1.xpose.msra.mxu0 0.0
    %513 = vmatprep.subr.mxu0 0.0
    %514 = vmatpush1.xpose.msra.mxu0 0.0
    %515 = vmatprep.subr.mxu0 0.0
    %516 = vmatpush1.xpose.msra.mxu0 0.0
    %517 = vmatprep.subr.mxu0 0.0
    %518 = vmatpush1.xpose.msra.mxu0 0.0
    %519 = vmatprep.subr.mxu0 0.0
    %520 = vmatpush1.xpose.msra.mxu0 0.0
    %521 = vmatprep.subr.mxu0 0.0
    %522 = vmatpush1.xpose.msra.mxu0 0.0
    %523 = vmatprep.subr.mxu0 0.0
    %524 = vmatpush1.xpose.msra.mxu0 0.0
    %525 = vmatprep.subr.mxu0 0.0
    %526 = vmatpush1.xpose.msra.mxu0 0.0
    %527 = vmatprep.subr.mxu0 0.0
    %528 = vmatpush1.xpose.msra.mxu0 0.0
    %529 = vmatprep.subr.mxu0 0.0
    %530 = vmatpush1.xpose.msra.mxu0 0.0
    %531 = vmatprep.subr.mxu0 0.0
    %532 = vmatpush1.xpose.msra.mxu0 0.0
    %533 = vmatprep.subr.mxu0 0.0
    %534 = vmatpush1.xpose.msra.mxu0 0.0
    %535 = vmatprep.subr.mxu0 0.0
    %536 = vmatpush1.xpose.msra.mxu0 0.0
    %537 = vmatprep.subr.mxu0 0.0
    %538 = vmatpush1.xpose.msra.mxu0 0.0
    %539 = vmatprep.subr.mxu0 0.0
    %540 = vmatpush1.xpose.msra.mxu0 0.0
    %541 = vmatprep.subr.mxu0 0.0
    %542 = vmatpush1.xpose.msra.mxu0 0.0
    %543 = vmatprep.subr.mxu0 0.0
    %544 = vmatpush1.xpose.msra.mxu0 0.0
    %545 = vmatprep.subr.mxu0 0.0
    %546 = vmatpush1.xpose.msra.mxu0 0.0
    %547 = vmatprep.subr.mxu0 0.0
    %548 = vmatpush1.xpose.msra.mxu0 0.0
    %549 = vmatprep.subr.mxu0 0.0
    %550 = vmatpush1.xpose.msra.mxu0 0.0
    %551 = vmatprep.subr.mxu0 0.0
    %552 = vmatpush1.xpose.msra.mxu0 0.0
    %553 = vmatprep.subr.mxu0 0.0
    %554 = vmatpush1.xpose.msra.mxu0 0.0
    %555 = vmatprep.subr.mxu0 0.0
    %556 = vmatpush1.xpose.msra.mxu0 0.0
    %557 = vmatprep.mubr.f32.mxu0 0.0
    %v558 = vand.u32 %v44, 4294901760
    %v559 = vsub.f32 %v44, %v558
    %v560 = vand.u32 %v559, 4294901760
    %v561 = vsub.f32 %v559, %v560
    %v562 = vand.u32 %v561, 4294901760
    %563 = vmatmul.mubr.f32.gmra.mrb[0].mxu0 %v562
    %v564 = vpop.f32.mrb[0].mxu0
    %v565 = vadd.f32 %v489, %v564
    %v566 = vpop.f32.mrb[0].mxu0
    %567 = vdwg.mxu0
    %568 = vmatprep.subr.mxu0 0.0
    %v569 = vand.u32 %v44, 4294901760
    %v570 = vsub.f32 %v44, %v569
    %v571 = vand.u32 %v570, 4294901760
    %v572 = vsub.f32 %v570, %v571
    %v573 = vand.u32 %v572, 4294901760
    %574 = vmatpush1.xpose.msra.mxu0 %v573
    %575 = vmatprep.subr.mxu0 0.0
    %576 = vmatpush1.xpose.msra.mxu0 0.0
    %577 = vmatprep.subr.mxu0 0.0
    %578 = vmatpush1.xpose.msra.mxu0 0.0
    %579 = vmatprep.subr.mxu0 0.0
    %580 = vmatpush1.xpose.msra.mxu0 0.0
    %581 = vmatprep.subr.mxu0 0.0
    %582 = vmatpush1.xpose.msra.mxu0 0.0
    %583 = vmatprep.subr.mxu0 0.0
    %584 = vmatpush1.xpose.msra.mxu0 0.0
    %585 = vmatprep.subr.mxu0 0.0
    %586 = vmatpush1.xpose.msra.mxu0 0.0
    %587 = vmatprep.subr.mxu0 0.0
    %588 = vmatpush1.xpose.msra.mxu0 0.0
    %589 = vmatprep.subr.mxu0 0.0
    %590 = vmatpush1.xpose.msra.mxu0 0.0
    %591 = vmatprep.subr.mxu0 0.0
    %592 = vmatpush1.xpose.msra.mxu0 0.0
    %593 = vmatprep.subr.mxu0 0.0
    %594 = vmatpush1.xpose.msra.mxu0 0.0
    %595 = vmatprep.subr.mxu0 0.0
    %596 = vmatpush1.xpose.msra.mxu0 0.0
    %597 = vmatprep.subr.mxu0 0.0
    %598 = vmatpush1.xpose.msra.mxu0 0.0
    %599 = vmatprep.subr.mxu0 0.0
    %600 = vmatpush1.xpose.msra.mxu0 0.0
    %601 = vmatprep.subr.mxu0 0.0
    %602 = vmatpush1.xpose.msra.mxu0 0.0
    %603 = vmatprep.subr.mxu0 0.0
    %604 = vmatpush1.xpose.msra.mxu0 0.0
    %605 = vmatprep.subr.mxu0 0.0
    %606 = vmatpush1.xpose.msra.mxu0 0.0
    %607 = vmatprep.subr.mxu0 0.0
    %608 = vmatpush1.xpose.msra.mxu0 0.0
    %609 = vmatprep.subr.mxu0 0.0
    %610 = vmatpush1.xpose.msra.mxu0 0.0
    %611 = vmatprep.subr.mxu0 0.0
    %612 = vmatpush1.xpose.msra.mxu0 0.0
    %613 = vmatprep.subr.mxu0 0.0
    %614 = vmatpush1.xpose.msra.mxu0 0.0
    %615 = vmatprep.subr.mxu0 0.0
    %616 = vmatpush1.xpose.msra.mxu0 0.0
    %617 = vmatprep.subr.mxu0 0.0
    %618 = vmatpush1.xpose.msra.mxu0 0.0
    %619 = vmatprep.subr.mxu0 0.0
    %620 = vmatpush1.xpose.msra.mxu0 0.0
    %621 = vmatprep.subr.mxu0 0.0
    %622 = vmatpush1.xpose.msra.mxu0 0.0
    %623 = vmatprep.subr.mxu0 0.0
    %624 = vmatpush1.xpose.msra.mxu0 0.0
    %625 = vmatprep.subr.mxu0 0.0
    %626 = vmatpush1.xpose.msra.mxu0 0.0
    %627 = vmatprep.subr.mxu0 0.0
    %628 = vmatpush1.xpose.msra.mxu0 0.0
    %629 = vmatprep.subr.mxu0 0.0
    %630 = vmatpush1.xpose.msra.mxu0 0.0
    %631 = vmatprep.subr.mxu0 0.0
    %632 = vmatpush1.xpose.msra.mxu0 0.0
    %633 = vmatprep.subr.mxu0 0.0
    %634 = vmatpush1.xpose.msra.mxu0 0.0
    %635 = vmatprep.subr.mxu0 0.0
    %636 = vmatpush1.xpose.msra.mxu0 0.0
    %637 = vmatprep.mubr.f32.mxu0 0.0
    %v638 = vand.u32 %v44, 4294901760
    %639 = vmatmul.mubr.f32.gmra.mrb[0].mxu0 %v638
    %v640 = vpop.f32.mrb[0].mxu0
    %v641 = vadd.f32 %v565, %v640
    %v642 = vpop.f32.mrb[0].mxu0
    %643 = vdwg.mxu0
    %644 = vmatprep.subr.mxu0 0.0
    %v645 = vand.u32 %v44, 4294901760
    %v646 = vsub.f32 %v44, %v645
    %647 = vmatpush1.xpose.msra.mxu0 %v646
    %648 = vmatprep.subr.mxu0 0.0
    %649 = vmatpush1.xpose.msra.mxu0 0.0
    %650 = vmatprep.subr.mxu0 0.0
    %651 = vmatpush1.xpose.msra.mxu0 0.0
    %652 = vmatprep.subr.mxu0 0.0
    %653 = vmatpush1.xpose.msra.mxu0 0.0
    %654 = vmatprep.subr.mxu0 0.0
    %655 = vmatpush1.xpose.msra.mxu0 0.0
    %656 = vmatprep.subr.mxu0 0.0
    %657 = vmatpush1.xpose.msra.mxu0 0.0
    %658 = vmatprep.subr.mxu0 0.0
    %659 = vmatpush1.xpose.msra.mxu0 0.0
    %660 = vmatprep.subr.mxu0 0.0
    %661 = vmatpush1.xpose.msra.mxu0 0.0
    %662 = vmatprep.subr.mxu0 0.0
    %663 = vmatpush1.xpose.msra.mxu0 0.0
    %664 = vmatprep.subr.mxu0 0.0
    %665 = vmatpush1.xpose.msra.mxu0 0.0
    %666 = vmatprep.subr.mxu0 0.0
    %667 = vmatpush1.xpose.msra.mxu0 0.0
    %668 = vmatprep.subr.mxu0 0.0
    %669 = vmatpush1.xpose.msra.mxu0 0.0
    %670 = vmatprep.subr.mxu0 0.0
    %671 = vmatpush1.xpose.msra.mxu0 0.0
    %672 = vmatprep.subr.mxu0 0.0
    %673 = vmatpush1.xpose.msra.mxu0 0.0
    %674 = vmatprep.subr.mxu0 0.0
    %675 = vmatpush1.xpose.msra.mxu0 0.0
    %676 = vmatprep.subr.mxu0 0.0
    %677 = vmatpush1.xpose.msra.mxu0 0.0
    %678 = vmatprep.subr.mxu0 0.0
    %679 = vmatpush1.xpose.msra.mxu0 0.0
    %680 = vmatprep.subr.mxu0 0.0
    %681 = vmatpush1.xpose.msra.mxu0 0.0
    %682 = vmatprep.subr.mxu0 0.0
    %683 = vmatpush1.xpose.msra.mxu0 0.0
    %684 = vmatprep.subr.mxu0 0.0
    %685 = vmatpush1.xpose.msra.mxu0 0.0
    %686 = vmatprep.subr.mxu0 0.0
    %687 = vmatpush1.xpose.msra.mxu0 0.0
    %688 = vmatprep.subr.mxu0 0.0
    %689 = vmatpush1.xpose.msra.mxu0 0.0
    %690 = vmatprep.subr.mxu0 0.0
    %691 = vmatpush1.xpose.msra.mxu0 0.0
    %692 = vmatprep.subr.mxu0 0.0
    %693 = vmatpush1.xpose.msra.mxu0 0.0
    %694 = vmatprep.subr.mxu0 0.0
    %695 = vmatpush1.xpose.msra.mxu0 0.0
    %696 = vmatprep.subr.mxu0 0.0
    %697 = vmatpush1.xpose.msra.mxu0 0.0
    %698 = vmatprep.subr.mxu0 0.0
    %699 = vmatpush1.xpose.msra.mxu0 0.0
    %700 = vmatprep.subr.mxu0 0.0
    %701 = vmatpush1.xpose.msra.mxu0 0.0
    %702 = vmatprep.subr.mxu0 0.0
    %703 = vmatpush1.xpose.msra.mxu0 0.0
    %704 = vmatprep.subr.mxu0 0.0
    %705 = vmatpush1.xpose.msra.mxu0 0.0
    %706 = vmatprep.subr.mxu0 0.0
    %707 = vmatpush1.xpose.msra.mxu0 0.0
    %708 = vmatprep.subr.mxu0 0.0
    %709 = vmatpush1.xpose.msra.mxu0 0.0
    %710 = vmatprep.mubr.f32.mxu0 0.0
    %v711 = vand.u32 %v44, 4294901760
    %v712 = vsub.f32 %v44, %v711
    %713 = vmatmul.mubr.f32.gmra.mrb[0].mxu0 %v712
    %v714 = vpop.f32.mrb[0].mxu0
    %v715 = vadd.f32 %v641, %v714
    %v716 = vpop.f32.mrb[0].mxu0
    %717 = vdwg.mxu0
    %718 = vmatprep.subr.mxu0 0.0
    %v719 = vand.u32 %v44, 4294901760
    %720 = vmatpush1.xpose.msra.mxu0 %v719
    %721 = vmatprep.subr.mxu0 0.0
    %722 = vmatpush1.xpose.msra.mxu0 0.0
    %723 = vmatprep.subr.mxu0 0.0
    %724 = vmatpush1.xpose.msra.mxu0 0.0
    %725 = vmatprep.subr.mxu0 0.0
    %726 = vmatpush1.xpose.msra.mxu0 0.0
    %727 = vmatprep.subr.mxu0 0.0
    %728 = vmatpush1.xpose.msra.mxu0 0.0
    %729 = vmatprep.subr.mxu0 0.0
    %730 = vmatpush1.xpose.msra.mxu0 0.0
    %731 = vmatprep.subr.mxu0 0.0
    %732 = vmatpush1.xpose.msra.mxu0 0.0
    %733 = vmatprep.subr.mxu0 0.0
    %734 = vmatpush1.xpose.msra.mxu0 0.0
    %735 = vmatprep.subr.mxu0 0.0
    %736 = vmatpush1.xpose.msra.mxu0 0.0
    %737 = vmatprep.subr.mxu0 0.0
    %738 = vmatpush1.xpose.msra.mxu0 0.0
    %739 = vmatprep.subr.mxu0 0.0
    %740 = vmatpush1.xpose.msra.mxu0 0.0
    %741 = vmatprep.subr.mxu0 0.0
    %742 = vmatpush1.xpose.msra.mxu0 0.0
    %743 = vmatprep.subr.mxu0 0.0
    %744 = vmatpush1.xpose.msra.mxu0 0.0
    %745 = vmatprep.subr.mxu0 0.0
    %746 = vmatpush1.xpose.msra.mxu0 0.0
    %747 = vmatprep.subr.mxu0 0.0
    %748 = vmatpush1.xpose.msra.mxu0 0.0
    %749 = vmatprep.subr.mxu0 0.0
    %750 = vmatpush1.xpose.msra.mxu0 0.0
    %751 = vmatprep.subr.mxu0 0.0
    %752 = vmatpush1.xpose.msra.mxu0 0.0
    %753 = vmatprep.subr.mxu0 0.0
    %754 = vmatpush1.xpose.msra.mxu0 0.0
    %755 = vmatprep.subr.mxu0 0.0
    %756 = vmatpush1.xpose.msra.mxu0 0.0
    %757 = vmatprep.subr.mxu0 0.0
    %758 = vmatpush1.xpose.msra.mxu0 0.0
    %759 = vmatprep.subr.mxu0 0.0
    %760 = vmatpush1.xpose.msra.mxu0 0.0
    %761 = vmatprep.subr.mxu0 0.0
    %762 = vmatpush1.xpose.msra.mxu0 0.0
    %763 = vmatprep.subr.mxu0 0.0
    %764 = vmatpush1.xpose.msra.mxu0 0.0
    %765 = vmatprep.subr.mxu0 0.0
    %766 = vmatpush1.xpose.msra.mxu0 0.0
    %767 = vmatprep.subr.mxu0 0.0
    %768 = vmatpush1.xpose.msra.mxu0 0.0
    %769 = vmatprep.subr.mxu0 0.0
    %770 = vmatpush1.xpose.msra.mxu0 0.0
    %771 = vmatprep.subr.mxu0 0.0
    %772 = vmatpush1.xpose.msra.mxu0 0.0
    %773 = vmatprep.subr.mxu0 0.0
    %774 = vmatpush1.xpose.msra.mxu0 0.0
    %775 = vmatprep.subr.mxu0 0.0
    %776 = vmatpush1.xpose.msra.mxu0 0.0
    %777 = vmatprep.subr.mxu0 0.0
    %778 = vmatpush1.xpose.msra.mxu0 0.0
    %779 = vmatprep.subr.mxu0 0.0
    %780 = vmatpush1.xpose.msra.mxu0 0.0
    %781 = vmatprep.subr.mxu0 0.0
    %782 = vmatpush1.xpose.msra.mxu0 0.0
    %783 = vmatprep.mubr.f32.mxu0 0.0
    %v784 = vand.u32 %v44, 4294901760
    %v785 = vsub.f32 %v44, %v784
    %v786 = vand.u32 %v785, 4294901760
    %787 = vmatmul.mubr.f32.gmra.mrb[0].mxu0 %v786
    %v788 = vpop.f32.mrb[0].mxu0
    %v789 = vadd.f32 %v715, %v788
    %v790 = vpop.f32.mrb[0].mxu0
    %791 = vdwg.mxu0
    %792 = vmatprep.subr.mxu0 0.0
    %v793 = vand.u32 %v44, 4294901760
    %v794 = vsub.f32 %v44, %v793
    %v795 = vand.u32 %v794, 4294901760
    %796 = vmatpush1.xpose.msra.mxu0 %v795
    %797 = vmatprep.subr.mxu0 0.0
    %798 = vmatpush1.xpose.msra.mxu0 0.0
    %799 = vmatprep.subr.mxu0 0.0
    %800 = vmatpush1.xpose.msra.mxu0 0.0
    %801 = vmatprep.subr.mxu0 0.0
    %802 = vmatpush1.xpose.msra.mxu0 0.0
    %803 = vmatprep.subr.mxu0 0.0
    %804 = vmatpush1.xpose.msra.mxu0 0.0
    %805 = vmatprep.subr.mxu0 0.0
    %806 = vmatpush1.xpose.msra.mxu0 0.0
    %807 = vmatprep.subr.mxu0 0.0
    %808 = vmatpush1.xpose.msra.mxu0 0.0
    %809 = vmatprep.subr.mxu0 0.0
    %810 = vmatpush1.xpose.msra.mxu0 0.0
    %811 = vmatprep.subr.mxu0 0.0
    %812 = vmatpush1.xpose.msra.mxu0 0.0
    %813 = vmatprep.subr.mxu0 0.0
    %814 = vmatpush1.xpose.msra.mxu0 0.0
    %815 = vmatprep.subr.mxu0 0.0
    %816 = vmatpush1.xpose.msra.mxu0 0.0
    %817 = vmatprep.subr.mxu0 0.0
    %818 = vmatpush1.xpose.msra.mxu0 0.0
    %819 = vmatprep.subr.mxu0 0.0
    %820 = vmatpush1.xpose.msra.mxu0 0.0
    %821 = vmatprep.subr.mxu0 0.0
    %822 = vmatpush1.xpose.msra.mxu0 0.0
    %823 = vmatprep.subr.mxu0 0.0
    %824 = vmatpush1.xpose.msra.mxu0 0.0
    %825 = vmatprep.subr.mxu0 0.0
    %826 = vmatpush1.xpose.msra.mxu0 0.0
    %827 = vmatprep.subr.mxu0 0.0
    %828 = vmatpush1.xpose.msra.mxu0 0.0
    %829 = vmatprep.subr.mxu0 0.0
    %830 = vmatpush1.xpose.msra.mxu0 0.0
    %831 = vmatprep.subr.mxu0 0.0
    %832 = vmatpush1.xpose.msra.mxu0 0.0
    %833 = vmatprep.subr.mxu0 0.0
    %834 = vmatpush1.xpose.msra.mxu0 0.0
    %835 = vmatprep.subr.mxu0 0.0
    %836 = vmatpush1.xpose.msra.mxu0 0.0
    %837 = vmatprep.subr.mxu0 0.0
    %838 = vmatpush1.xpose.msra.mxu0 0.0
    %839 = vmatprep.subr.mxu0 0.0
    %840 = vmatpush1.xpose.msra.mxu0 0.0
    %841 = vmatprep.subr.mxu0 0.0
    %842 = vmatpush1.xpose.msra.mxu0 0.0
    %843 = vmatprep.subr.mxu0 0.0
    %844 = vmatpush1.xpose.msra.mxu0 0.0
    %845 = vmatprep.subr.mxu0 0.0
    %846 = vmatpush1.xpose.msra.mxu0 0.0
    %847 = vmatprep.subr.mxu0 0.0
    %848 = vmatpush1.xpose.msra.mxu0 0.0
    %849 = vmatprep.subr.mxu0 0.0
    %850 = vmatpush1.xpose.msra.mxu0 0.0
    %851 = vmatprep.subr.mxu0 0.0
    %852 = vmatpush1.xpose.msra.mxu0 0.0
    %853 = vmatprep.subr.mxu0 0.0
    %854 = vmatpush1.xpose.msra.mxu0 0.0
    %855 = vmatprep.subr.mxu0 0.0
    %856 = vmatpush1.xpose.msra.mxu0 0.0
    %857 = vmatprep.subr.mxu0 0.0
    %858 = vmatpush1.xpose.msra.mxu0 0.0
    %859 = vmatprep.mubr.f32.mxu0 0.0
    %v860 = vand.u32 %v44, 4294901760
    %861 = vmatmul.mubr.f32.gmra.mrb[0].mxu0 %v860
    %v862 = vpop.f32.mrb[0].mxu0
    %v863 = vadd.f32 %v789, %v862
    %v864 = vpop.f32.mrb[0].mxu0
    %865 = vdwg.mxu0
    %866 = vmatprep.subr.mxu0 0.0
    %v867 = vand.u32 %v44, 4294901760
    %868 = vmatpush1.xpose.msra.mxu0 %v867
    %869 = vmatprep.subr.mxu0 0.0
    %870 = vmatpush1.xpose.msra.mxu0 0.0
    %871 = vmatprep.subr.mxu0 0.0
    %872 = vmatpush1.xpose.msra.mxu0 0.0
    %873 = vmatprep.subr.mxu0 0.0
    %874 = vmatpush1.xpose.msra.mxu0 0.0
    %875 = vmatprep.subr.mxu0 0.0
    %876 = vmatpush1.xpose.msra.mxu0 0.0
    %877 = vmatprep.subr.mxu0 0.0
    %878 = vmatpush1.xpose.msra.mxu0 0.0
    %879 = vmatprep.subr.mxu0 0.0
    %880 = vmatpush1.xpose.msra.mxu0 0.0
    %881 = vmatprep.subr.mxu0 0.0
    %882 = vmatpush1.xpose.msra.mxu0 0.0
    %883 = vmatprep.subr.mxu0 0.0
    %884 = vmatpush1.xpose.msra.mxu0 0.0
    %885 = vmatprep.subr.mxu0 0.0
    %886 = vmatpush1.xpose.msra.mxu0 0.0
    %887 = vmatprep.subr.mxu0 0.0
    %888 = vmatpush1.xpose.msra.mxu0 0.0
    %889 = vmatprep.subr.mxu0 0.0
    %890 = vmatpush1.xpose.msra.mxu0 0.0
    %891 = vmatprep.subr.mxu0 0.0
    %892 = vmatpush1.xpose.msra.mxu0 0.0
    %893 = vmatprep.subr.mxu0 0.0
    %894 = vmatpush1.xpose.msra.mxu0 0.0
    %895 = vmatprep.subr.mxu0 0.0
    %896 = vmatpush1.xpose.msra.mxu0 0.0
    %897 = vmatprep.subr.mxu0 0.0
    %898 = vmatpush1.xpose.msra.mxu0 0.0
    %899 = vmatprep.subr.mxu0 0.0
    %900 = vmatpush1.xpose.msra.mxu0 0.0
    %901 = vmatprep.subr.mxu0 0.0
    %902 = vmatpush1.xpose.msra.mxu0 0.0
    %903 = vmatprep.subr.mxu0 0.0
    %904 = vmatpush1.xpose.msra.mxu0 0.0
    %905 = vmatprep.subr.mxu0 0.0
    %906 = vmatpush1.xpose.msra.mxu0 0.0
    %907 = vmatprep.subr.mxu0 0.0
    %908 = vmatpush1.xpose.msra.mxu0 0.0
    %909 = vmatprep.subr.mxu0 0.0
    %910 = vmatpush1.xpose.msra.mxu0 0.0
    %911 = vmatprep.subr.mxu0 0.0
    %912 = vmatpush1.xpose.msra.mxu0 0.0
    %913 = vmatprep.subr.mxu0 0.0
    %914 = vmatpush1.xpose.msra.mxu0 0.0
    %915 = vmatprep.subr.mxu0 0.0
    %916 = vmatpush1.xpose.msra.mxu0 0.0
    %917 = vmatprep.subr.mxu0 0.0
    %918 = vmatpush1.xpose.msra.mxu0 0.0
    %919 = vmatprep.subr.mxu0 0.0
    %920 = vmatpush1.xpose.msra.mxu0 0.0
    %921 = vmatprep.subr.mxu0 0.0
    %922 = vmatpush1.xpose.msra.mxu0 0.0
    %923 = vmatprep.subr.mxu0 0.0
    %924 = vmatpush1.xpose.msra.mxu0 0.0
    %925 = vmatprep.subr.mxu0 0.0
    %926 = vmatpush1.xpose.msra.mxu0 0.0
    %927 = vmatprep.subr.mxu0 0.0
    %928 = vmatpush1.xpose.msra.mxu0 0.0
    %929 = vmatprep.subr.mxu0 0.0
    %930 = vmatpush1.xpose.msra.mxu0 0.0
    %931 = vmatprep.mubr.f32.mxu0 0.0
    %v932 = vand.u32 %v44, 4294901760
    %933 = vmatmul.mubr.f32.gmra.mrb[0].mxu0 %v932
    %v934 = vpop.f32.mrb[0].mxu0
    %v935 = vadd.f32 %v863, %v934
    %v936 = vpop.f32.mrb[0].mxu0
    %937 = vdwg.mxu0
    %v938 = vmul.f32 %v935, 0.003921569
    %vm939 = vcmask 7168
    %v940 = vsel %vm939, %v39, 0.0
    %941 = vadd.xlane.f32.xlu0 %v940
    %v942 = vpop.xlane.xlu0 %941
    %v943 = vrot.slane %v942, 4
    %v944 = vadd.f32 %v942, %v943
    %v945 = vrot.slane %v944, 2
    %v946 = vadd.f32 %v944, %v945
    %v947 = vrot.slane %v946, 1
    %v948 = vadd.f32 %v946, %v947
    %s949 = vtos %v948
    %v950 = vstv %s949
    %v951 = vmul.f32 %v950, 0.0009765625
    %v952 = vsel %vm939, %v41, 0.0
    %953 = vadd.xlane.f32.xlu0 %v952
    %v954 = vpop.xlane.xlu0 %953
    %v955 = vrot.slane %v954, 4
    %v956 = vadd.f32 %v954, %v955
    %v957 = vrot.slane %v956, 2
    %v958 = vadd.f32 %v956, %v957
    %v959 = vrot.slane %v958, 1
    %v960 = vadd.f32 %v958, %v959
    %s961 = vtos %v960
    %v962 = vstv %s961
    %v963 = vmul.f32 %v962, 0.0009765625
    %v964 = vsub.f32 %v36, %v951
    %v965 = vsub.f32 %v37, %v963
    %v966 = vmul.f32 %v964, %v964
    %967 = vadd.xlane.f32.xlu0 %v966
    %v968 = vpop.xlane.xlu0 %967
    %v969 = vrot.slane %v968, 4
    %v970 = vadd.f32 %v968, %v969
    %v971 = vrot.slane %v970, 2
    %v972 = vadd.f32 %v970, %v971
    %v973 = vrot.slane %v972, 1
    %v974 = vadd.f32 %v972, %v973
    %s975 = vtos %v974
    %v976 = vstv %s975
    %v977 = vmul.f32 %v976, 0.0009775171
    %v978 = vmul.f32 %v965, %v965
    %979 = vadd.xlane.f32.xlu0 %v978
    %v980 = vpop.xlane.xlu0 %979
    %v981 = vrot.slane %v980, 4
    %v982 = vadd.f32 %v980, %v981
    %v983 = vrot.slane %v982, 2
    %v984 = vadd.f32 %v982, %v983
    %v985 = vrot.slane %v984, 1
    %v986 = vadd.f32 %v984, %v985
    %s987 = vtos %v986
    %v988 = vstv %s987
    %v989 = vmul.f32 %v988, 0.0009775171
    %v990 = vadd.f32 %v977, %v989
    %v991 = vsub.f32 %v951, %v963
    %v992 = vmul.f32 %v991, %v991
    %v993 = vadd.f32 %v990, %v992
    %v994 = vrcp.pop %v993
    %v995 = vmul.f32 %v994, 2.0
    %v996 = vmul.f32 %v938, %v995
    %vm997 = vcmask 64512
    %998 = vst.msk [vmem:[#allocation7] sm:$0xff] %vm997, %v996
    // Predicated region
    $region18: #{tpu_custom_call.1} parent=1 // pred_check
      _
    $region19: #{tpu_custom_call.1} parent=1 // pred_check_branch
      %1000 = sbr.rel (0) target = $region21
    $region20: #{tpu_custom_call.1} parent=1 // pred_region
      %s1002 = ssub.s32 128, 128
      %1003 = vsyncadd [#allocation4], %s1002
      %s1005 = sshll.u32 [#allocation7], 4
      %s1006 = int_to_ptr.vmem [resolvable:$true] %s1005
      %1008 = dma.vmem_to_hbm [thread:$0]  %s1006, 128, %s2, [#allocation4]
    $region21: #{tpu_custom_call.1} parent=1 // pred_fallthru
      _
    // Predicated region
    $region22: #{tpu_custom_call.1} parent=1 // pred_check
      _
    $region23: #{tpu_custom_call.1} parent=1 // pred_check_branch
      %1010 = sbr.rel (0) target = $region25
    $region24: #{tpu_custom_call.1} parent=1 // pred_region
      %1011 = dma.done [#allocation4], 128
    $region25: #{tpu_custom_call.1} parent=1 // pred_fallthru
      _
    %1012 = vsyncpa [#allocation3], 1
    %1013 = vsyncpa [#allocation6], 1
    %1014 = vsyncpa [#allocation4], 1

</llo_original>
